<compile_context>
chip_gen: v6e
topology: v6e:2x2x1
jax: 0.10.0
libtpu: 0.0.40
codegen_flags: <defaults>
</compile_context>

<pallas_src>
import math
import functools

import jax
import jax.numpy as jnp
from jax import lax
from jax.experimental import pallas as pl
from jax.experimental.pallas import tpu as pltpu


def _pick_tile(dim, pref, align):
    """Largest `align`-multiple divisor of `dim` that is <= `pref`; `dim` if dim <= pref.

    Falls back to the full extent only when no aligned divisor exists (rare, odd dims);
    preferred tiles are kept small enough that even the fallback stays within VMEM for
    realistic GPT-2 shapes.
    """
    if dim <= pref:
        return dim
    t = (pref // align) * align
    while t >= align:
        if dim % t == 0:
            return t
        t -= align
    return dim


def _mk_params(semantics, vmem_need_bytes):
    # Size the scoped-VMEM request to actual need (x2 headroom), not a blanket number,
    # so the compiler keeps spill/internal headroom even on v7x's 64 MiB part.
    limit = int(min(max(2 * vmem_need_bytes, 16 * 1024 * 1024), 40 * 1024 * 1024))
    return pltpu.CompilerParams(dimension_semantics=semantics,
                                vmem_limit_bytes=limit)


# ----------------------------- Kernel 1: Conv1D (y = x @ W + b) ---------------
def _linear_kernel_acc(x_ref, w_ref, b_ref, o_ref, acc_ref):
    kk = pl.program_id(2)

    @pl.when(kk == 0)
    def _():
        acc_ref[...] = jnp.zeros_like(acc_ref)

    # bf16 operands (cast in the wrapper), f32 MXU accumulate.
    acc_ref[...] += jnp.dot(x_ref[...], w_ref[...],
                            preferred_element_type=jnp.float32)

    @pl.when(kk == pl.num_programs(2) - 1)
    def _():
        o_ref[...] = (acc_ref[...] + b_ref[...]).astype(o_ref.dtype)


def _linear_kernel_noacc(x_ref, w_ref, b_ref, o_ref):
    # K fits a single block: no accumulator pass needed.
    o_ref[...] = (jnp.dot(x_ref[...], w_ref[...],
                          preferred_element_type=jnp.float32)
                  + b_ref[...]).astype(o_ref.dtype)


def conv1d(x2d, w, b, *, tm=512, tn=512, tk=1024):
    """GPT-2 Conv1D: x2d [M,K] @ w [K,N] + b [N] -> f32 [M,N] (bf16 MXU, f32 accumulate)."""
    M, K = x2d.shape
    N = w.shape[1]
    tm = _pick_tile(M, tm, 8)     # sublane-aligned
    tn = _pick_tile(N, tn, 128)   # lane-aligned
    tk = _pick_tile(K, tk, 128)   # lane dim of x block / sublane dim of w block

    xb = x2d.astype(jnp.bfloat16)          # halves x/w HBM + VMEM traffic
    wb = w.astype(jnp.bfloat16)
    b2d = b.reshape(1, N).astype(jnp.float32)

    nk = K // tk
    grid = (M // tm, N // tn, nk)
    in_specs = [
        pl.BlockSpec((tm, tk), lambda i, j, kk: (i, kk)),
        pl.BlockSpec((tk, tn), lambda i, j, kk: (kk, j)),
        pl.BlockSpec((1, tn), lambda i, j, kk: (0, j)),
    ]
    out_spec = pl.BlockSpec((tm, tn), lambda i, j, kk: (i, j))

    in_bytes = (tm * tk + tk * tn) * 2 + tn * 4
    out_bytes = tm * tn * 4
    if nk == 1:
        kernel, scratch, scratch_bytes = _linear_kernel_noacc, [], 0
    else:
        kernel = _linear_kernel_acc
        scratch = [pltpu.VMEM((tm, tn), jnp.float32)]
        scratch_bytes = tm * tn * 4

    return pl.pallas_call(
        kernel,
        out_shape=jax.ShapeDtypeStruct((M, N), jnp.float32),
        grid_spec=pltpu.PrefetchScalarGridSpec(
            num_scalar_prefetch=0,
            grid=grid,
            in_specs=in_specs,
            out_specs=out_spec,
            scratch_shapes=scratch,
        ),
        compiler_params=_mk_params(("parallel", "parallel", "arbitrary"),
                                   2 * in_bytes + 2 * out_bytes + scratch_bytes),
    )(xb, wb, b2d)


# --------------- Kernel 2: head-fused flash-style causal attention ------------
def _flash_attn_kernel(q_ref, k_ref, v_ref, o_ref, m_ref, l_ref, acc_ref, *, n_head, d):
    q_idx = pl.program_id(1)
    kv_idx = pl.program_id(2)
    tq = q_ref.shape[1]
    tk = k_ref.shape[1]

    @pl.when(kv_idx == 0)
    def _():
        m_ref[...] = jnp.full_like(m_ref, -jnp.inf)
        l_ref[...] = jnp.zeros_like(l_ref)
        acc_ref[...] = jnp.zeros_like(acc_ref)

    def block_update(masked):
        q_all = q_ref[0]            # (tq, H*d) bf16; scale already folded in (wrapper)
        k_all = k_ref[0]            # (tk, H*d) bf16
        v_all = v_ref[0]            # (tk, H*d) bf16
        acc_all = acc_ref[...]      # (tq, H*d) f32, one lane-dense load
        new_acc = []
        for h in range(n_head):     # static unroll over heads: amortizes grid overhead
            lo = h * d
            q = q_all[:, lo:lo + d]
            k = k_all[:, lo:lo + d]
            v = v_all[:, lo:lo + d]
            # s = q @ k^T without materializing a transpose: contract the d axis.
            s = lax.dot_general(q, k, (((1,), (1,)), ((), ())),
                                preferred_element_type=jnp.float32)
            if masked:
                # Only the diagonal block is masked (tq == tk), block-local coordinates.
                row = lax.broadcasted_iota(jnp.int32, (tq, tk), 0)
                col = lax.broadcasted_iota(jnp.int32, (tq, tk), 1)
                s = jnp.where(col <= row, s, -10000.0)   # torch's -10000 additive bias
            m_prev = m_ref[h]       # (tq, 1)
            l_prev = l_ref[h]
            m_new = jnp.maximum(m_prev, s.max(axis=-1, keepdims=True))
            alpha = jnp.exp(m_prev - m_new)
            p = jnp.exp(s - m_new)
            l_ref[h] = alpha * l_prev + p.sum(axis=-1, keepdims=True)
            m_ref[h] = m_new
            pv = lax.dot_general(p.astype(jnp.bfloat16), v,
                                 (((1,), (0,)), ((), ())),
                                 preferred_element_type=jnp.float32)
            new_acc.append(alpha * acc_all[:, lo:lo + d] + pv)
        acc_ref[...] = jnp.concatenate(new_acc, axis=-1)   # one lane-dense store

    # Causal block structure: blocks strictly above the diagonal do nothing (and their
    # DMA is suppressed via the clamped index_map); lower blocks need no mask.
    @pl.when(kv_idx < q_idx)
    def _():
        block_update(masked=False)

    @pl.when(kv_idx == q_idx)
    def _():
        block_update(masked=True)

    @pl.when(kv_idx == pl.num_programs(2) - 1)
    def _():
        acc_all = acc_ref[...]
        out = []
        for h in range(n_head):
            inv_l = pl.reciprocal(l_ref[h], approx=True)   # EUP slot, off the VPU
            out.append(acc_all[:, h * d:(h + 1) * d] * inv_l)
        # Single lane-dense (full nx-wide) store: heads land merged, GPT-2 layout.
        o_ref[0] = jnp.concatenate(out, axis=-1).astype(o_ref.dtype)


def flash_attention(q, k, v, *, n_head, tile_t=256):
    """q, k, v: [B, T, nx] bf16 (heads packed along nx) -> [B, T, nx] bf16, heads merged."""
    B, T, nx = q.shape
    assert nx % n_head == 0
    d = nx // n_head
    tt = _pick_tile(T, tile_t, 16)     # bf16 sublane alignment
    nq = T // tt
    grid = (B, nq, nq)                 # KV axis last / "arbitrary" (online softmax)

    kern = functools.partial(_flash_attn_kernel, n_head=n_head, d=d)

    q_spec = pl.BlockSpec((1, tt, nx), lambda b, i, j: (b, i, 0))
    # Clamp KV block index: skipped upper-triangular steps re-use the resident block,
    # so the pipeliner issues no DMA for them (~halves K/V HBM reads).
    kv_spec = pl.BlockSpec((1, tt, nx), lambda b, i, j: (b, jnp.minimum(i, j), 0))

    in_bytes = 3 * tt * nx * 2
    out_bytes = tt * nx * 2
    scratch_bytes = tt * nx * 4 + 2 * n_head * tt * 128 * 4   # acc + lane-padded m/l

    return pl.pallas_call(
        kern,
        out_shape=jax.ShapeDtypeStruct((B, T, nx), jnp.bfloat16),
        grid_spec=pltpu.PrefetchScalarGridSpec(
            num_scalar_prefetch=0,
            grid=grid,
            in_specs=[q_spec, kv_spec, kv_spec],
            out_specs=pl.BlockSpec((1, tt, nx), lambda b, i, j: (b, i, 0)),
            scratch_shapes=[
                pltpu.VMEM((n_head, tt, 1), jnp.float32),   # m (running max) per head
                pltpu.VMEM((n_head, tt, 1), jnp.float32),   # l (running denom) per head
                pltpu.VMEM((tt, nx), jnp.float32),          # acc, all heads lane-packed
            ],
        ),
        compiler_params=_mk_params(("parallel", "parallel", "arbitrary"),
                                   2 * in_bytes + 2 * out_bytes + scratch_bytes),
    )(q, k, v)


# ------------------------------- Module wrapper -------------------------------
class AttentionPallas:
    def __init__(self, nx, n_ctx, n_head, scale=False, key=None):
        assert nx % n_head == 0
        self.nx = nx
        self.n_ctx = n_ctx
        self.n_head = n_head
        self.scale = scale
        k1, k2 = jax.random.split(key, 2)
        # Conv1D params: weight (nin, nout) ~ N(0, 0.02), bias zeros (kept f32 masters).
        self.w_attn = 0.02 * jax.random.normal(k1, (nx, 3 * nx), jnp.float32)
        self.b_attn = jnp.zeros((3 * nx,), jnp.float32)
        self.w_proj = 0.02 * jax.random.normal(k2, (nx, nx), jnp.float32)
        self.b_proj = jnp.zeros((nx,), jnp.float32)

    def __call__(self, x):
        # x: [B, T, nx]
        B, T, nx = x.shape
        H = self.n_head
        d = nx // H

        # c_attn (bf16 MXU matmul, f32 output so `present` keeps f32 semantics).
        qkv = conv1d(x.reshape(B * T, nx), self.w_attn, self.b_attn)
        qkv = qkv.reshape(B, T, 3 * nx)
        q, k, v = qkv[..., :nx], qkv[..., nx:2 * nx], qkv[..., 2 * nx:]

        # present = stack(key.transpose(-2,-1), value) -> [2, B, H, T, d]  (f32 glue)
        split_heads = lambda t: t.reshape(B, T, H, d).transpose(0, 2, 1, 3)
        present = jnp.stack([split_heads(k), split_heads(v)], axis=0)

        # Head-fused flash attention on [B, T, nx] blocks: no split/merge transposes.
        # Scale folded into q (fused with the bf16 cast in XLA).
        scale = (1.0 / math.sqrt(d)) if self.scale else 1.0
        a = flash_attention((q * scale).astype(jnp.bfloat16),
                            k.astype(jnp.bfloat16),
                            v.astype(jnp.bfloat16),
                            n_head=H)                      # [B, T, nx] bf16, merged

        # c_proj (resid dropout is identity in eval); bf16 input feeds the bf16 MXU path.
        a = conv1d(a.reshape(B * T, nx), self.w_proj, self.b_proj).reshape(B, T, nx)
        return a, present


# ----------------------------- Pure-JAX reference -----------------------------
def _reference(mod, x):
    B, T, nx = x.shape
    H, d = mod.n_head, nx // mod.n_head
    qkv = x.reshape(B * T, nx) @ mod.w_attn + mod.b_attn
    q, k, v = jnp.split(qkv.reshape(B, T, 3 * nx), 3, axis=2)
    sh = lambda t: t.reshape(B, T, H, d).transpose(0, 2, 1, 3)
    qh, kh, vh = sh(q), sh(k), sh(v)
    w = jnp.einsum("bhqd,bhkd->bhqk", qh, kh)
    if mod.scale:
        w = w / math.sqrt(d)
    bmask = jnp.tril(jnp.ones((T, T), jnp.float32))
    w = w * bmask - 10000.0 * (1.0 - bmask)
    w = jax.nn.softmax(w, axis=-1)
    a = jnp.einsum("bhqk,bhkd->bhqd", w, vh)
    a = a.transpose(0, 2, 1, 3).reshape(B, T, nx)
    a = a.reshape(B * T, nx) @ mod.w_proj + mod.b_proj
    return a.reshape(B, T, nx), jnp.stack([kh, vh], axis=0)


# ------------------------------------ Main ------------------------------------
if __name__ == "__main__":
    key = jax.random.PRNGKey(0)
    kx, kp = jax.random.split(key)

    B, T, nx, n_head = 2, 8, 32, 4
    mod = AttentionPallas(nx=nx, n_ctx=T, n_head=n_head, scale=True, key=kp)

    x = jax.random.normal(kx, (B, T, nx), jnp.float32)

    a, present = mod(x)
    a = jax.block_until_ready(a)
    present = jax.block_until_ready(present)

    a_ref, present_ref = _reference(mod, x)
    assert a.shape == (B, T, nx)
    assert present.shape == (2, B, n_head, T, nx // n_head)
    # Tolerances reflect bf16 matmul operands (f32 accumulate) + approx reciprocal.
    err_a = float(jnp.max(jnp.abs(a - a_ref)))
    err_p = float(jnp.max(jnp.abs(present - present_ref)))
    assert jnp.allclose(a, a_ref, atol=3e-3, rtol=3e-3), err_a
    assert jnp.allclose(present, present_ref, atol=3e-3, rtol=3e-3), err_p

    print("KERNEL_OK")
</pallas_src>

<mosaic_0001>
module attributes {stable_mosaic.version = 11 : i64} {
  func.func @_linear_kernel_noacc(%arg0: i32, %arg1: i32, %arg2: i32, %arg3: memref<16x32xbf16, #tpu.memory_space<vmem>>, %arg4: memref<32x96xbf16, #tpu.memory_space<vmem>>, %arg5: memref<1x96xf32, #tpu.memory_space<vmem>>, %arg6: memref<16x96xf32, #tpu.memory_space<vmem>>) attributes {dimension_semantics = [#tpu.dimension_semantics<parallel>, #tpu.dimension_semantics<parallel>, #tpu.dimension_semantics<arbitrary>], iteration_bounds = array<i64: 1, 1, 1>, scalar_prefetch = 0 : i64, scratch_operands = 0 : i64, tpu.core_type = #tpu.core_type<tc>, window_params = [{transform_indices = @transform_0, window_bounds = array<i64: 16, 32>}, {transform_indices = @transform_1, window_bounds = array<i64: 32, 96>}, {transform_indices = @transform_2, window_bounds = array<i64: 1, 96>}, {transform_indices = @transform_3, window_bounds = array<i64: 16, 96>}]} {
    %c0 = arith.constant 0 : index
    %c0_0 = arith.constant 0 : index
    %0 = vector.load %arg3[%c0, %c0_0] : memref<16x32xbf16, #tpu.memory_space<vmem>>, vector<16x32xbf16>
    %c0_1 = arith.constant 0 : index
    %c0_2 = arith.constant 0 : index
    %1 = vector.load %arg4[%c0_1, %c0_2] : memref<32x96xbf16, #tpu.memory_space<vmem>>, vector<32x96xbf16>
    %cst = arith.constant dense<0.000000e+00> : vector<16x96xf32>
    %2 = tpu.matmul %0, %1, %cst {dimension_numbers = #tpu.dot_dimension_numbers<[1], [0], [0], [1], [0, 0, 1, 1], [], []>} : vector<16x32xbf16>, vector<32x96xbf16>, vector<16x96xf32> -> vector<16x96xf32>
    %c0_3 = arith.constant 0 : index
    %c0_4 = arith.constant 0 : index
    %3 = vector.load %arg5[%c0_3, %c0_4] : memref<1x96xf32, #tpu.memory_space<vmem>>, vector<1x96xf32>
    %4 = vector.broadcast %3 : vector<1x96xf32> to vector<16x96xf32>
    %5 = arith.addf %2, %4 : vector<16x96xf32>
    %c0_5 = arith.constant 0 : index
    %c0_6 = arith.constant 0 : index
    %6 = vector.load %arg6[%c0_5, %c0_6] : memref<16x96xf32, #tpu.memory_space<vmem>>, vector<16x96xf32>
    tpu.vector_store %arg6[%c0_5, %c0_6], %5 {strides = array<i32>} : memref<16x96xf32, #tpu.memory_space<vmem>>, vector<16x96xf32>,
    return
  }
  func.func @transform_0(%arg0: i32, %arg1: i32, %arg2: i32) -> (i32, i32) {
    %c0_i32 = arith.constant 0 : i32
    return %arg0, %arg2 : i32, i32
  }
  func.func @transform_1(%arg0: i32, %arg1: i32, %arg2: i32) -> (i32, i32) {
    %c0_i32 = arith.constant 0 : i32
    return %arg2, %arg1 : i32, i32
  }
  func.func @transform_2(%arg0: i32, %arg1: i32, %arg2: i32) -> (i32, i32) {
    %c0_i32 = arith.constant 0 : i32
    %c0_i32_0 = arith.constant 0 : i32
    return %c0_i32, %arg1 : i32, i32
  }
  func.func @transform_3(%arg0: i32, %arg1: i32, %arg2: i32) -> (i32, i32) {
    %c0_i32 = arith.constant 0 : i32
    return %arg0, %arg1 : i32, i32
  }
}

</mosaic_0001>

<llo_original>
// kernel: tpu_custom_call.1
$region0: #{tpu_custom_call.1}
  #allocation0 [shape = 'u32[]', space=smem, size = 0x4, offset = 0x4, fixed_abs, tag = 'smem constant byte address 0x4 - core index']
  #allocation1 [shape = 'u32[144,128]{1,0:T(1,128)}', space=vmem, size = 0x12000, scoped, tag = 'internal scratch']
  %s0 = inlined_call_operand.hbm [shape: bf16[16,32], index: 0, kind: input, shape index: {}]
  %s1 = inlined_call_operand.hbm [shape: bf16[32,96], index: 1, kind: input, shape index: {}]
  %s2 = inlined_call_operand.vmem [shape: f32[1,96], index: 2, kind: input, shape index: {}]
  %s3 = inlined_call_operand.hbm [shape: f32[16,96], index: 3, kind: output, shape index: {}]
  %s4 = sld [smem:[#allocation0]]
  $region30: #{tpu_custom_call.1} parent=0
    _
  %s6 = ssub.s32 1, %s4
  %s7 = scalar_select 0, %s6, %s4
  $region1: #{tpu_custom_call.1} parent=0
    #allocation2 [shape = 'u8[4096]{0}', space=vmem, size = 0x1000, scoped, tag = 'input window, operand 0, single buffered']
    #allocation3 [shape = 's32[1]{0}', space=sflag, size = 0x4, scoped, tag = 'scoped memory for tpu_custom_call.1']
    #allocation4 [shape = 's32[1]{0}', space=sflag, size = 0x4, scoped, tag = 'scoped memory for tpu_custom_call.1']
    #allocation5 [shape = 'u8[8192]{0}', space=vmem, size = 0x2000, scoped, tag = 'input window, operand 1, single buffered']
    #allocation6 [shape = 's32[1]{0}', space=sflag, size = 0x4, scoped, tag = 'scoped memory for tpu_custom_call.1']
    #allocation7 [shape = 'u8[8192]{0}', space=vmem, size = 0x2000, scoped, tag = 'output window, operand 0, single buffered']
    %8 = vsyncpa [#allocation3], 0
    %9 = vsyncpa [#allocation6], 0
    %10 = vsyncpa [#allocation4], 0
    // Predicated region
    $region2: #{tpu_custom_call.1} parent=1 // pred_check
      _
    $region3: #{tpu_custom_call.1} parent=1 // pred_check_branch
      %12 = sbr.rel (0) target = $region5
    $region4: #{tpu_custom_call.1} parent=1 // pred_region
      %s14 = ssub.s32 128, 128
      %15 = vsyncadd [#allocation3], %s14
      %s16 = sshll.u32 [#allocation2], 4
      %s17 = int_to_ptr.vmem [resolvable:$true] %s16
      %22 = dma.hbm_to_vmem [thread:$0]  %s0, 128, %s17, [#allocation3], 64, 64, 4
    $region5: #{tpu_custom_call.1} parent=1 // pred_fallthru
      _
    // Predicated region
    $region6: #{tpu_custom_call.1} parent=1 // pred_check
      _
    $region7: #{tpu_custom_call.1} parent=1 // pred_check_branch
      %24 = sbr.rel (0) target = $region9
    $region8: #{tpu_custom_call.1} parent=1 // pred_region
      %s26 = ssub.s32 256, 256
      %27 = vsyncadd [#allocation6], %s26
      %s28 = sshll.u32 [#allocation5], 4
      %s29 = int_to_ptr.vmem [resolvable:$true] %s28
      %34 = dma.hbm_to_vmem [thread:$0]  %s1, 256, %s29, [#allocation6], 64, 64, 4
    $region9: #{tpu_custom_call.1} parent=1 // pred_fallthru
      _
    // Predicated region
    $region10: #{tpu_custom_call.1} parent=1 // pred_check
      _
    $region11: #{tpu_custom_call.1} parent=1 // pred_check_branch
      %36 = sbr.rel (0) target = $region13
    $region12: #{tpu_custom_call.1} parent=1 // pred_region
      _
    $region13: #{tpu_custom_call.1} parent=1 // pred_fallthru
      _
    // Predicated region
    $region14: #{tpu_custom_call.1} parent=1 // pred_check
      _
    $region15: #{tpu_custom_call.1} parent=1 // pred_check_branch
      %38 = sbr.rel (0) target = $region17
    $region16: #{tpu_custom_call.1} parent=1 // pred_region
      %39 = dma.done [#allocation3], 128
    $region17: #{tpu_custom_call.1} parent=1 // pred_fallthru
      _
    // Predicated region
    $region18: #{tpu_custom_call.1} parent=1 // pred_check
      _
    $region19: #{tpu_custom_call.1} parent=1 // pred_check_branch
      %41 = sbr.rel (0) target = $region21
    $region20: #{tpu_custom_call.1} parent=1 // pred_region
      %42 = dma.done [#allocation6], 256
    $region21: #{tpu_custom_call.1} parent=1 // pred_fallthru
      _
    %v44 = vld [vmem:[#allocation2] sm:$0xf]
    %v45 = vld [vmem:[#allocation2 + $0x4] sm:$0xf]
    %v46 = vld [vmem:[#allocation5] sm:$0xf]
    %v47 = vld [vmem:[#allocation5 + $0x4] sm:$0xf]
    %v48 = vld [vmem:[#allocation5 + $0x8] sm:$0xf]
    %v49 = vld [vmem:[#allocation5 + $0xc] sm:$0xf]
    %v50 = vld [vmem:[%s2] sm:$0x1]
    %v52 = vlaneseq
    %v53 = vshrl.u32 %v52, 7
    %v54 = vsub.s32 0, %v53
    %v55 = vrot.slane %v50, %v54
    %v59 = vunpack.c.l.b16 %v44
    %v60 = vunpack.c.l.b16 %v45
    %v61 = vpack.c.b16 %v60, %v59
    %v66 = vunpack.c.l.b16 %v46
    %v67 = vunpack.c.l.b16 %v47
    %v68 = vunpack.c.l.b16 %v48
    %v69 = vunpack.c.l.b16 %v49
    %v70 = vpack.c.b16 %v67, %v66
    %v71 = vpack.c.b16 %v69, %v68
    %vm74 = vcmask 261120
    %v76 = vsel %vm74, %v61, 0
    %78 = vmatprep.subr.bf16.mxu0 0
    %79 = vmatpush1.bf16.msra.mxu0 0
    %80 = vmatprep.subr.bf16.mxu0 0
    %81 = vmatpush1.bf16.msra.mxu0 0
    %82 = vmatprep.subr.bf16.mxu0 0
    %83 = vmatpush1.bf16.msra.mxu0 0
    %84 = vmatprep.subr.bf16.mxu0 0
    %85 = vmatpush1.bf16.msra.mxu0 0
    %86 = vmatprep.subr.bf16.mxu0 0
    %87 = vmatpush1.bf16.msra.mxu0 0
    %88 = vmatprep.subr.bf16.mxu0 0
    %89 = vmatpush1.bf16.msra.mxu0 0
    %90 = vmatprep.subr.bf16.mxu0 0
    %91 = vmatpush1.bf16.msra.mxu0 %v71
    %92 = vmatprep.subr.bf16.mxu0 0
    %93 = vmatpush1.bf16.msra.mxu0 %v70
    %94 = vmatprep.subr.bf16.mxu0 0
    %95 = vmatpush2.bf16.msra.mxu0 0
    %96 = vmatprep.subr.bf16.mxu0 0
    %97 = vmatpush2.bf16.msra.mxu0 0
    %98 = vmatprep.subr.bf16.mxu0 0
    %99 = vmatpush2.bf16.msra.mxu0 0
    %100 = vmatprep.subr.bf16.mxu0 0
    %101 = vmatpush2.bf16.msra.mxu0 0
    %102 = vmatprep.subr.bf16.mxu0 0
    %103 = vmatpush2.bf16.msra.mxu0 0
    %104 = vmatprep.subr.bf16.mxu0 0
    %105 = vmatpush2.bf16.msra.mxu0 0
    %106 = vmatprep.subr.bf16.mxu0 0
    %107 = vmatpush2.bf16.msra.mxu0 0
    %108 = vmatprep.subr.bf16.mxu0 0
    %109 = vmatpush2.bf16.msra.mxu0 0
    %110 = vmatprep.mubr.bf16.mxu0 0
    %111 = vmatmul.mubr.bf16.gmra.mxu0 %v76
    %v112 = vpop.f32.mrf.mxu0
    %v113 = vadd.f32 %v55, %v112
    %v114 = vpop.f32.mrf.mxu0
    %v115 = vpop.f32.mrf.mxu0
    %v116 = vadd.f32 %v55, %v115
    %v117 = vpop.f32.mrf.mxu0
    %118 = vdwg.mxu0
    %vm119 = vcmask 785408
    %120 = vst.msk [vmem:[#allocation7] sm:$0xff] %vm119, %v113
    %121 = vst.msk [vmem:[#allocation7 + $0x8] sm:$0xff] %vm119, %v116
    // Predicated region
    $region22: #{tpu_custom_call.1} parent=1 // pred_check
      _
    $region23: #{tpu_custom_call.1} parent=1 // pred_check_branch
      %123 = sbr.rel (0) target = $region25
    $region24: #{tpu_custom_call.1} parent=1 // pred_region
      %s125 = ssub.s32 256, 256
      %126 = vsyncadd [#allocation4], %s125
      %s127 = sshll.u32 [#allocation7], 4
      %s128 = int_to_ptr.vmem [resolvable:$true] %s127
      %133 = dma.vmem_to_hbm [thread:$0]  %s128, 256, %s3, [#allocation4], 128, 128, 8
    $region25: #{tpu_custom_call.1} parent=1 // pred_fallthru
      _
    // Predicated region
    $region26: #{tpu_custom_call.1} parent=1 // pred_check
      _
    $region27: #{tpu_custom_call.1} parent=1 // pred_check_branch
      %135 = sbr.rel (0) target = $region29
    $region28: #{tpu_custom_call.1} parent=1 // pred_region
      %136 = dma.done [#allocation4], 256
    $region29: #{tpu_custom_call.1} parent=1 // pred_fallthru
      _
    %137 = vsyncpa [#allocation3], 1
    %138 = vsyncpa [#allocation6], 1
    %139 = vsyncpa [#allocation4], 1

</llo_original>
